<compile_context>
chip_gen: v5e
topology: v5e:2x2
jax: 0.10.0
libtpu: 0.0.40
codegen_flags: <defaults>
</compile_context>

<pallas_src>
import functools
import numbers

import jax
import jax.numpy as jnp
import numpy as np
from jax.experimental import pallas as pl
from jax.experimental.pallas import tpu as pltpu


_TARGET_BLOCK_BYTES = 2 * 1024 * 1024    # per widest streamed buffer (>~1 MiB knee)
_VMEM_LIMIT_BYTES = 32 * 1024 * 1024     # safe on v5e/v6e (128 MiB phys) and v7x (64 MiB phys)
_MIN_PALLAS_BYTES = 128 * 1024           # below this a fused XLA add beats a kernel launch
_MAX_RESIDENT_COLS = 64 * 1024           # cap (elements) for the VMEM-resident broadcast row


# ----------------------------- kernels --------------------------------------


def _dense_add_kernel(x_ref, y_ref, o_ref, *, compute_dtype, alpha):
    # alpha is a static Python number baked in at trace time (==1 skips the mul).
    x = x_ref[...].astype(compute_dtype)
    y = y_ref[...].astype(compute_dtype)
    if alpha != 1:
        y = y * alpha
    o_ref[...] = (x + y).astype(o_ref.dtype)


def _dense_add_alpha_kernel(alpha_ref, x_ref, y_ref, o_ref, *, compute_dtype):
    # Traced alpha: 32-bit scalar in SMEM (f32 for float compute, i32 otherwise).
    a = alpha_ref[0].astype(compute_dtype)
    o_ref[...] = (x_ref[...].astype(compute_dtype)
                  + a * y_ref[...].astype(compute_dtype)).astype(o_ref.dtype)


def _scale_add_const_kernel(sc_ref, d_ref, o_ref, *, compute_dtype):
    # out = s * dense + c  (scalar operand + alpha folded into SMEM scalars).
    s = sc_ref[0].astype(compute_dtype)
    c = sc_ref[1].astype(compute_dtype)
    o_ref[...] = (s * d_ref[...].astype(compute_dtype) + c).astype(o_ref.dtype)


def _row_bcast_kernel(row_ref, d_ref, o_ref, *, compute_dtype, dense_scale, row_scale):
    # dense block: (block_rows, cols); row: (1, cols) VMEM-resident, broadcast
    # across sublanes on the VPU (no HBM broadcast materialization).
    d = d_ref[...].astype(compute_dtype)
    r = row_ref[...].astype(compute_dtype)
    if dense_scale != 1:
        d = d * dense_scale
    if row_scale != 1:
        r = r * row_scale
    o_ref[...] = (d + r).astype(o_ref.dtype)


# ----------------------------- tiling helpers -------------------------------


def _pick_cols(n):
    """Largest multiple-of-128 divisor of n that is <= 4096 (lane-dense cols)."""
    if n % 128 != 0:
        return None
    cols = 128
    for k in range(2, 33):
        c = 128 * k
        if n % c == 0:
            cols = c
    return cols


def _pick_block_rows(rows, cols, max_itemsize, sub):
    """Byte-targeted block rows, rounded to sublane packing, >= 2 grid steps."""
    br = max(1, _TARGET_BLOCK_BYTES // (cols * max_itemsize))
    br = min(br, rows)
    if br < rows:
        br = max(sub, (br // sub) * sub)
    # Prefer >= 2 grid steps so a v7x megacore can split the "parallel" axis;
    # on v5e/v6e the extra step costs ~0.35 us and is negligible at this size.
    if rows > sub and pl.cdiv(rows, br) < 2:
        half = (pl.cdiv(rows, 2) + sub - 1) // sub * sub
        br = min(rows, max(sub, half))
    return br


def _launch(kernel_fn, smem_arrays, resident_arrays, dense_arrays, rows, cols, out_dtype):
    """Stream (rows, cols) dense arrays over a 1-D parallel row grid."""
    streamed = list(dense_arrays)
    itemsizes = [a.dtype.itemsize for a in streamed] + [jnp.dtype(out_dtype).itemsize]
    max_it = max(itemsizes)
    sub = max(8, 32 // min(itemsizes))          # 8 / 16 / 32 rows for 4 / 2 / 1-byte dtypes
    block_rows = _pick_block_rows(rows, cols, max_it, sub)
    grid = (pl.cdiv(rows, block_rows),)

    dense_spec = pl.BlockSpec((block_rows, cols), lambda i: (i, 0))
    in_specs = (
        [pl.BlockSpec(memory_space=pltpu.MemorySpace.SMEM)] * len(smem_arrays)
        + [pl.BlockSpec(r.shape, lambda i: (0, 0)) for r in resident_arrays]
        + [dense_spec] * len(dense_arrays)
    )

    bytes_accessed = (sum(int(a.size) * a.dtype.itemsize
                          for a in list(resident_arrays) + streamed)
                      + rows * cols * jnp.dtype(out_dtype).itemsize)

    return pl.pallas_call(
        kernel_fn,
        out_shape=jax.ShapeDtypeStruct((rows, cols), out_dtype),
        grid=grid,
        in_specs=in_specs,
        out_specs=pl.BlockSpec((block_rows, cols), lambda i: (i, 0)),
        compiler_params=pltpu.CompilerParams(
            dimension_semantics=("parallel",),
            vmem_limit_bytes=_VMEM_LIMIT_BYTES),
        cost_estimate=pl.CostEstimate(
            flops=2 * rows * cols,
            transcendentals=0,
            bytes_accessed=int(bytes_accessed)),
    )(*smem_arrays, *resident_arrays, *dense_arrays)


def _suffix_broadcast_cols(shape, out_shape):
    """If `shape` broadcasts as (1,...,1, out_shape[k:]), return prod(out_shape[k:])."""
    r = len(out_shape)
    s = (1,) * (r - len(shape)) + tuple(shape)
    k = 0
    while k < r and s[k] == 1:
        k += 1
    if tuple(s[k:]) != tuple(out_shape[k:]):
        return None
    t = 1
    for d in out_shape[k:]:
        t *= int(d)
    return t


def _row_path_ok(t):
    return t is not None and t % 128 == 0 and 128 <= t <= _MAX_RESIDENT_COLS


# ----------------------------- public wrapper --------------------------------


def deephi_add(x, other, alpha=1, *, min_pallas_bytes=_MIN_PALLAS_BYTES):
    """Pallas implementation of deephi_Add.forward(input, other, alpha)."""
    x = jnp.asarray(x)
    other = jnp.asarray(other)
    out_dtype = jnp.result_type(x.dtype, other.dtype)
    out_shape = jnp.broadcast_shapes(x.shape, other.shape)
    n = int(np.prod(out_shape)) if out_shape else 1
    if n == 0:
        return jnp.zeros(out_shape, out_dtype)

    floating = jnp.issubdtype(out_dtype, jnp.floating)
    compute_dtype = jnp.promote_types(out_dtype, jnp.float32) if floating else out_dtype
    scalar_dtype = jnp.float32 if floating else jnp.int32

    alpha_static = isinstance(alpha, numbers.Number) and not isinstance(alpha, jax.Array)
    if alpha_static:
        if not floating:
            if float(alpha) != int(alpha):
                raise ValueError(
                    "For integral input tensors, alpha must be an integer (torch semantics).")
            alpha_val = int(alpha)
        else:
            alpha_val = float(alpha)
    else:
        alpha_val = None

    def xla_add():
        a = x.astype(compute_dtype)
        b = other.astype(compute_dtype)
        if alpha_static and alpha_val == 1:
            r = a + b
        else:
            al = alpha_val if alpha_static else jnp.asarray(alpha).astype(compute_dtype)
            r = a + al * b
        return r.astype(out_dtype)

    # Early-out: tiny tensors are cheaper as a fused XLA add than a kernel launch.
    if n * jnp.dtype(out_dtype).itemsize < min_pallas_bytes:
        return xla_add()

    x_scalar = x.size == 1
    o_scalar = other.size == 1
    x_full = x.size == n
    o_full = other.size == n

    # --- scalar-operand fast paths: scalar (and alpha) ride in SMEM ----------
    if o_scalar != x_scalar:
        if o_scalar:
            dense = x
            al = (jnp.asarray(alpha_val, scalar_dtype) if alpha_static
                  else jnp.asarray(alpha).astype(scalar_dtype))
            s = jnp.asarray(1, scalar_dtype)
            c = al * other.reshape(()).astype(scalar_dtype)
        else:
            dense = other
            s = (jnp.asarray(alpha_val, scalar_dtype) if alpha_static
                 else jnp.asarray(alpha).astype(scalar_dtype))
            c = x.reshape(()).astype(scalar_dtype)
        cols = _pick_cols(n)
        if cols is None:
            return xla_add()
        rows = n // cols
        kern = functools.partial(_scale_add_const_kernel, compute_dtype=compute_dtype)
        out2 = _launch(kern, [jnp.stack([s, c])], [], [dense.reshape(rows, cols)],
                       rows, cols, out_dtype)
        return out2.reshape(out_shape)

    # --- both operands dense (the common residual add) -----------------------
    if x_full and o_full:
        cols = _pick_cols(n)
        if cols is None:
            return xla_add()
        rows = n // cols
        xd = x.reshape(rows, cols)
        yd = other.reshape(rows, cols)
        if alpha_static:
            kern = functools.partial(_dense_add_kernel,
                                     compute_dtype=compute_dtype, alpha=alpha_val)
            out2 = _launch(kern, [], [], [xd, yd], rows, cols, out_dtype)
        else:
            a_arr = jnp.asarray(alpha).astype(scalar_dtype).reshape(1)
            kern = functools.partial(_dense_add_alpha_kernel, compute_dtype=compute_dtype)
            out2 = _launch(kern, [a_arr], [], [xd, yd], rows, cols, out_dtype)
        return out2.reshape(out_shape)

    # --- suffix broadcast: keep the small operand VMEM-resident, stream dense -
    if x_full and not o_full:
        t = _suffix_broadcast_cols(other.shape, out_shape)
        if _row_path_ok(t):
            rows = n // t
            row = other.reshape(1, t)
            if alpha_static:
                dense_scale, row_scale = 1, alpha_val
            else:
                # Pre-scale the tiny resident row by the traced alpha in XLA.
                row = row.astype(compute_dtype) * jnp.asarray(alpha).astype(compute_dtype)
                dense_scale, row_scale = 1, 1
            kern = functools.partial(_row_bcast_kernel, compute_dtype=compute_dtype,
                                     dense_scale=dense_scale, row_scale=row_scale)
            out2 = _launch(kern, [], [row], [x.reshape(rows, t)], rows, t, out_dtype)
            return out2.reshape(out_shape)
    if o_full and not x_full and alpha_static:
        t = _suffix_broadcast_cols(x.shape, out_shape)
        if _row_path_ok(t):
            rows = n // t
            row = x.reshape(1, t)
            kern = functools.partial(_row_bcast_kernel, compute_dtype=compute_dtype,
                                     dense_scale=alpha_val, row_scale=1)
            out2 = _launch(kern, [], [row], [other.reshape(rows, t)], rows, t, out_dtype)
            return out2.reshape(out_shape)

    # TODO(synk): non-suffix broadcasts (e.g. a (1,C,1,1) channel bias) and sizes
    # with no multiple-of-128 divisor fall back to XLA's fused broadcast-add
    # instead of materializing a broadcast / padded copy for the Pallas kernel.
    return xla_add()


# ----------------------------- self-test -------------------------------------


if __name__ == "__main__":
    key = jax.random.PRNGKey(0)
    k1, k2, k3, k4, k5, k6, k7, k8 = jax.random.split(key, 8)

    # 1) Standard residual add, equal shapes, default alpha=1 (Pallas dense path).
    x1 = jax.random.normal(k1, (2, 4, 16, 16), dtype=jnp.float32)
    y1 = jax.random.normal(k2, (2, 4, 16, 16), dtype=jnp.float32)
    out1 = jax.block_until_ready(deephi_add(x1, y1, min_pallas_bytes=0))
    np.testing.assert_allclose(np.asarray(out1), np.asarray(x1 + y1), rtol=1e-6, atol=1e-6)

    # 2) Static alpha != 1 with mixed dtypes (bf16 promoted inside the kernel).
    x2 = jax.random.normal(k3, (2, 8, 32, 32), dtype=jnp.float32)
    y2 = jax.random.normal(k4, (2, 8, 32, 32), dtype=jnp.bfloat16)
    out2 = jax.block_until_ready(deephi_add(x2, y2, alpha=0.5, min_pallas_bytes=0))
    ref2 = x2 + 0.5 * y2.astype(jnp.float32)
    np.testing.assert_allclose(np.asarray(out2), np.asarray(ref2), rtol=1e-6, atol=1e-6)

    # 3) Scalar `other` broadcast (scalar + alpha fold into SMEM, no HBM copy).
    out3 = jax.block_until_ready(deephi_add(x1, jnp.float32(0.75), alpha=2.0,
                                            min_pallas_bytes=0))
    np.testing.assert_allclose(np.asarray(out3), np.asarray(x1 + 2.0 * 0.75),
                               rtol=1e-6, atol=1e-6)

    # 4) Default threshold, multi-step grid with a partial tail block.
    x4 = jax.random.normal(k5, (3, 25, 40, 128), dtype=jnp.float32)
    y4 = jax.random.normal(k6, (3, 25, 40, 128), dtype=jnp.float32)
    out4 = jax.block_until_ready(deephi_add(x4, y4))
    np.testing.assert_allclose(np.asarray(out4), np.asarray(x4 + y4), rtol=1e-6, atol=1e-6)

    # 5) Suffix broadcast: (D,) bias kept VMEM-resident, dense operand streamed.
    x5 = jax.random.normal(k7, (2, 8, 16, 128), dtype=jnp.float32)
    b5 = jax.random.normal(k8, (128,), dtype=jnp.float32)
    out5 = jax.block_until_ready(deephi_add(x5, b5, alpha=1.5, min_pallas_bytes=0))
    np.testing.assert_allclose(np.asarray(out5), np.asarray(x5 + 1.5 * b5),
                               rtol=1e-6, atol=1e-6)

    # 6) Traced alpha -> SMEM path.
    out6 = jax.block_until_ready(deephi_add(x1, y1, alpha=jnp.float32(0.25),
                                            min_pallas_bytes=0))
    np.testing.assert_allclose(np.asarray(out6), np.asarray(x1 + 0.25 * y1),
                               rtol=1e-6, atol=1e-6)

    # 7) Integer tensors with integer alpha.
    xi = jnp.arange(2 * 4 * 8 * 16, dtype=jnp.int32).reshape(2, 4, 8, 16)
    yi = (jnp.arange(2 * 4 * 8 * 16, dtype=jnp.int32).reshape(2, 4, 8, 16) * 7) % 113
    out7 = jax.block_until_ready(deephi_add(xi, yi, alpha=3, min_pallas_bytes=0))
    np.testing.assert_array_equal(np.asarray(out7), np.asarray(xi + 3 * yi))

    # 8) XLA fallbacks: channel-bias broadcast and an awkward (non-128) size.
    b8 = jax.random.normal(k8, (1, 4, 1, 1), dtype=jnp.float32)
    out8 = jax.block_until_ready(deephi_add(x1, b8, alpha=2.0))
    np.testing.assert_allclose(np.asarray(out8), np.asarray(x1 + 2.0 * b8),
                               rtol=1e-6, atol=1e-6)
    x9 = jax.random.normal(k1, (3, 5, 7), dtype=jnp.float32)
    y9 = jax.random.normal(k2, (3, 5, 7), dtype=jnp.float32)
    out9 = jax.block_until_ready(deephi_add(x9, y9, min_pallas_bytes=0))
    np.testing.assert_allclose(np.asarray(out9), np.asarray(x9 + y9), rtol=1e-6, atol=1e-6)

    print("KERNEL_OK")
</pallas_src>

<mosaic_0001>
module attributes {stable_mosaic.version = 11 : i64} {
  func.func @_dense_add_kernel(%arg0: i32, %arg1: memref<1x2048xf32, #tpu.memory_space<vmem>>, %arg2: memref<1x2048xf32, #tpu.memory_space<vmem>>, %arg3: memref<1x2048xf32, #tpu.memory_space<vmem>>) attributes {dimension_semantics = [#tpu.dimension_semantics<parallel>], iteration_bounds = array<i64: 1>, scalar_prefetch = 0 : i64, scratch_operands = 0 : i64, tpu.core_type = #tpu.core_type<tc>, window_params = [{transform_indices = @transform_0, window_bounds = array<i64: 1, 2048>}, {transform_indices = @transform_1, window_bounds = array<i64: 1, 2048>}, {transform_indices = @transform_2, window_bounds = array<i64: 1, 2048>}]} {
    %c0 = arith.constant 0 : index
    %c0_0 = arith.constant 0 : index
    %0 = vector.load %arg1[%c0, %c0_0] : memref<1x2048xf32, #tpu.memory_space<vmem>>, vector<1x2048xf32>
    %c0_1 = arith.constant 0 : index
    %c0_2 = arith.constant 0 : index
    %1 = vector.load %arg2[%c0_1, %c0_2] : memref<1x2048xf32, #tpu.memory_space<vmem>>, vector<1x2048xf32>
    %2 = arith.addf %0, %1 : vector<1x2048xf32>
    %c0_3 = arith.constant 0 : index
    %c0_4 = arith.constant 0 : index
    %3 = vector.load %arg3[%c0_3, %c0_4] : memref<1x2048xf32, #tpu.memory_space<vmem>>, vector<1x2048xf32>
    tpu.vector_store %arg3[%c0_3, %c0_4], %2 {strides = array<i32>} : memref<1x2048xf32, #tpu.memory_space<vmem>>, vector<1x2048xf32>,
    return
  }
  func.func @transform_0(%arg0: i32) -> (i32, i32) {
    %c0_i32 = arith.constant 0 : i32
    %c0_i32_0 = arith.constant 0 : i32
    return %arg0, %c0_i32 : i32, i32
  }
  func.func @transform_1(%arg0: i32) -> (i32, i32) {
    %c0_i32 = arith.constant 0 : i32
    %c0_i32_0 = arith.constant 0 : i32
    return %arg0, %c0_i32 : i32, i32
  }
  func.func @transform_2(%arg0: i32) -> (i32, i32) {
    %c0_i32 = arith.constant 0 : i32
    %c0_i32_0 = arith.constant 0 : i32
    return %arg0, %c0_i32 : i32, i32
  }
}

</mosaic_0001>

<llo_original>
// kernel: tpu_custom_call.1
$region0: #{tpu_custom_call.1}
  #allocation0 [shape = 'u32[]', space=smem, size = 0x4, offset = 0x4, fixed_abs, tag = 'smem constant byte address 0x4 - core index']
  #allocation1 [shape = 'u32[72,128]{1,0:T(1,128)}', space=vmem, size = 0x9000, scoped, tag = 'internal scratch']
  %s0 = inlined_call_operand.hbm [shape: f32[1,2048], index: 0, kind: input, shape index: {}]
  %s1 = inlined_call_operand.hbm [shape: f32[1,2048], index: 1, kind: input, shape index: {}]
  %s2 = inlined_call_operand.hbm [shape: f32[1,2048], index: 2, kind: output, shape index: {}]
  %s3 = sld [smem:[#allocation0]]
  $region26: #{tpu_custom_call.1} parent=0
    _
  %s5 = ssub.s32 1, %s3
  %s6 = scalar_select 0, %s5, %s3
  $region1: #{tpu_custom_call.1} parent=0
    #allocation2 [shape = 'u8[8192]{0}', space=vmem, size = 0x2000, scoped, tag = 'input window, operand 0, single buffered']
    #allocation3 [shape = 's32[1]{0}', space=sflag, size = 0x4, scoped, tag = 'scoped memory for tpu_custom_call.1']
    #allocation4 [shape = 's32[1]{0}', space=sflag, size = 0x4, scoped, tag = 'scoped memory for tpu_custom_call.1']
    #allocation5 [shape = 'u8[8192]{0}', space=vmem, size = 0x2000, scoped, tag = 'input window, operand 1, single buffered']
    #allocation6 [shape = 's32[1]{0}', space=sflag, size = 0x4, scoped, tag = 'scoped memory for tpu_custom_call.1']
    #allocation7 [shape = 'u8[8192]{0}', space=vmem, size = 0x2000, scoped, tag = 'output window, operand 0, single buffered']
    %7 = vsyncpa [#allocation3], 0
    %8 = vsyncpa [#allocation6], 0
    %9 = vsyncpa [#allocation4], 0
    // Predicated region
    $region2: #{tpu_custom_call.1} parent=1 // pred_check
      _
    $region3: #{tpu_custom_call.1} parent=1 // pred_check_branch
      %11 = sbr.rel (0) target = $region5
    $region4: #{tpu_custom_call.1} parent=1 // pred_region
      %13 = vsyncadd [#allocation3], 0
      %s15 = sshll.u32 %s0, 4
      %s16 = int_to_ptr.hbm [resolvable:$true] %s15
      %s17 = sshll.u32 [#allocation2], 4
      %s18 = int_to_ptr.vmem [resolvable:$true] %s17
      %20 = dma.hbm_to_vmem [thread:$0]  %s16, 256, %s18, [#allocation3]
    $region5: #{tpu_custom_call.1} parent=1 // pred_fallthru
      _
    // Predicated region
    $region6: #{tpu_custom_call.1} parent=1 // pred_check
      _
    $region7: #{tpu_custom_call.1} parent=1 // pred_check_branch
      %22 = sbr.rel (0) target = $region9
    $region8: #{tpu_custom_call.1} parent=1 // pred_region
      %24 = vsyncadd [#allocation6], 0
      %s26 = sshll.u32 %s1, 4
      %s27 = int_to_ptr.hbm [resolvable:$true] %s26
      %s28 = sshll.u32 [#allocation5], 4
      %s29 = int_to_ptr.vmem [resolvable:$true] %s28
      %31 = dma.hbm_to_vmem [thread:$0]  %s27, 256, %s29, [#allocation6]
    $region9: #{tpu_custom_call.1} parent=1 // pred_fallthru
      _
    // Predicated region
    $region10: #{tpu_custom_call.1} parent=1 // pred_check
      _
    $region11: #{tpu_custom_call.1} parent=1 // pred_check_branch
      %33 = sbr.rel (0) target = $region13
    $region12: #{tpu_custom_call.1} parent=1 // pred_region
      %35 = dma.done [#allocation3], 256
    $region13: #{tpu_custom_call.1} parent=1 // pred_fallthru
      _
    // Predicated region
    $region14: #{tpu_custom_call.1} parent=1 // pred_check
      _
    $region15: #{tpu_custom_call.1} parent=1 // pred_check_branch
      %37 = sbr.rel (0) target = $region17
    $region16: #{tpu_custom_call.1} parent=1 // pred_region
      %39 = dma.done [#allocation6], 256
    $region17: #{tpu_custom_call.1} parent=1 // pred_fallthru
      _
    %v40 = vld [vmem:[#allocation2] sm:$0xff]
    %v41 = vld [vmem:[#allocation2 + $0x8] sm:$0xff]
    %v42 = vld [vmem:[#allocation5] sm:$0xff]
    %v43 = vld [vmem:[#allocation5 + $0x8] sm:$0xff]
    %v44 = vadd.f32 %v40, %v42
    %v45 = vadd.f32 %v41, %v43
    %46 = vst [vmem:[#allocation7] sm:$0xff] %v44
    %47 = vst [vmem:[#allocation7 + $0x8] sm:$0xff] %v45
    // Predicated region
    $region18: #{tpu_custom_call.1} parent=1 // pred_check
      _
    $region19: #{tpu_custom_call.1} parent=1 // pred_check_branch
      %49 = sbr.rel (0) target = $region21
    $region20: #{tpu_custom_call.1} parent=1 // pred_region
      %51 = vsyncadd [#allocation4], 0
      %s53 = sshll.u32 [#allocation7], 4
      %s54 = int_to_ptr.vmem [resolvable:$true] %s53
      %s55 = sshll.u32 %s2, 4
      %s56 = int_to_ptr.hbm [resolvable:$true] %s55
      %58 = dma.vmem_to_hbm [thread:$0]  %s54, 256, %s56, [#allocation4]
    $region21: #{tpu_custom_call.1} parent=1 // pred_fallthru
      _
    // Predicated region
    $region22: #{tpu_custom_call.1} parent=1 // pred_check
      _
    $region23: #{tpu_custom_call.1} parent=1 // pred_check_branch
      %60 = sbr.rel (0) target = $region25
    $region24: #{tpu_custom_call.1} parent=1 // pred_region
      %62 = dma.done [#allocation4], 256
    $region25: #{tpu_custom_call.1} parent=1 // pred_fallthru
      _
    %63 = vsyncpa [#allocation3], 1
    %64 = vsyncpa [#allocation6], 1
    %65 = vsyncpa [#allocation4], 1

</llo_original>
